<compile_context>
chip_gen: v6e
topology: v6e:2x2x1
jax: 0.10.0
libtpu: 0.0.40
codegen_flags: <defaults>
</compile_context>

<pallas_src>
import jax
import jax.numpy as jnp
from jax.experimental import pallas as pl
from jax.experimental.pallas import tpu as pltpu


def _decomp_kernel(x_ref, t_ref, seasonal_ref, trend_ref):
    # x_ref block:        (S,  TL)  -- full sequence, lane tile (lane-dense, f32)
    # t_ref block:        (TS, S)   -- row tile of the fused trend operator
    # seasonal/trend:     (TS, TL)
    x = x_ref[...]                                    # (S, TL) f32
    op = t_ref[...]                                   # (TS, S)
    rhs = x.astype(op.dtype) if op.dtype != x.dtype else x
    trend = jnp.dot(op, rhs, preferred_element_type=jnp.float32)   # (TS, TL) f32

    ts = trend_ref.shape[0]
    if ts == x_ref.shape[0]:
        x_rows = x                                    # common case: no seq row-tiling
    else:
        row0 = pl.multiple_of(pl.program_id(0) * ts, ts)
        x_rows = x_ref[pl.ds(row0, ts), :]

    trend_ref[...] = trend.astype(trend_ref.dtype)
    # Subtract in f32 against the f32 accumulator, cast once.
    seasonal_ref[...] = (x_rows - trend).astype(seasonal_ref.dtype)


def _build_trend_operator(seq_len, kernel_size, dtype=jnp.float32):
    """Fused (S, S) linear operator: 0.7 * moving-average + 0.3 * FFT low-pass."""
    S, K = seq_len, kernel_size
    p = K // 2
    eye = jnp.eye(S, dtype=jnp.float32)

    # Moving average with replicate ("edge") padding, stride 1  -> (S, S) matrix.
    padded = jnp.pad(eye, ((p, p), (0, 0)), mode="edge")              # (S + 2p, S)
    csum = jnp.concatenate(
        [jnp.zeros((1, S), jnp.float32), jnp.cumsum(padded, axis=0)], axis=0)
    ma = (csum[K:] - csum[:-K]) / K                                   # (S, S)

    # rfft -> zero frequencies >= cutoff -> irfft, applied to the identity.
    freq = jnp.fft.rfft(eye, axis=0)                                  # (S//2+1, S)
    n_f = freq.shape[0]
    cutoff = int(0.2 * n_f)                                           # matches torch int()
    keep = (jnp.arange(n_f) < cutoff)[:, None]
    lowpass = jnp.fft.irfft(jnp.where(keep, freq, 0.0), n=S, axis=0)  # (S, S)

    return (0.7 * ma + 0.3 * lowpass).astype(dtype)


def _pick_seq_tile(seq_len, max_rows=1024):
    """Operator row-tile.  Full rows for typical TimeMixer S; row-tile for long S."""
    if seq_len <= max_rows:
        return seq_len
    for ts in (512, 384, 256, 128, 64, 32, 16, 8):
        if seq_len % ts == 0:
            return ts
    return seq_len  # no clean divisor; may require a larger vmem_limit_bytes for huge S


def _pick_lane_tile(padded_lanes, seq_len, ts, max_tile=2048, budget_bytes=12 << 20):
    """Largest 128-multiple divisor of the padded lane axis that fits the VMEM budget."""
    candidates = [t for t in range(128, min(padded_lanes, max_tile) + 1, 128)
                  if padded_lanes % t == 0]

    def fits(t):
        # double-buffered: x block + operator block + 2 output blocks, all f32
        return 2 * 4 * (seq_len * t + ts * seq_len + 2 * ts * t) <= budget_bytes

    fitting = [t for t in candidates if fits(t)] or [128]
    tl = max(fitting)
    # Prefer >=2 lane tiles (keeps v7x's second TensorCore busy) while staying lane-dense.
    if tl == padded_lanes and padded_lanes >= 256:
        smaller = [t for t in fitting if t <= padded_lanes // 2]
        if smaller:
            tl = max(smaller)
    return tl


def enhanced_decomposition(x, kernel_size=25, operator_dtype=jnp.float32):
    """x: (B, S, F) float32. Returns (seasonal, trend), each (B, S, F)."""
    B, S, F = x.shape
    lanes = B * F
    padded_lanes = ((lanes + 127) // 128) * 128

    trend_op = _build_trend_operator(S, kernel_size, operator_dtype)

    # Fold batch+features into one lane axis: (B,S,F) -> (S, B*F), zero-pad to 128k lanes.
    x2d = jnp.transpose(x, (1, 0, 2)).reshape(S, lanes)
    if padded_lanes != lanes:
        x2d = jnp.pad(x2d, ((0, 0), (0, padded_lanes - lanes)))

    ts = _pick_seq_tile(S)
    tl = _pick_lane_tile(padded_lanes, S, ts)
    n_seq = S // ts
    n_lane = padded_lanes // tl

    cost = pl.CostEstimate(
        flops=2 * S * S * padded_lanes,
        transcendentals=0,
        bytes_accessed=4 * (3 * S * padded_lanes + S * S),
    )

    seasonal2d, trend2d = pl.pallas_call(
        _decomp_kernel,
        out_shape=(jax.ShapeDtypeStruct((S, padded_lanes), x.dtype),   # seasonal
                   jax.ShapeDtypeStruct((S, padded_lanes), x.dtype)),  # trend
        grid_spec=pltpu.PrefetchScalarGridSpec(
            num_scalar_prefetch=0,
            grid=(n_seq, n_lane),
            in_specs=[
                pl.BlockSpec((S, tl), lambda si, li: (0, li)),    # x: full seq, lane tile
                pl.BlockSpec((ts, S), lambda si, li: (si, 0)),    # fused trend operator rows
            ],
            out_specs=[
                pl.BlockSpec((ts, tl), lambda si, li: (si, li)),  # seasonal
                pl.BlockSpec((ts, tl), lambda si, li: (si, li)),  # trend
            ],
        ),
        compiler_params=pltpu.CompilerParams(
            dimension_semantics=("parallel", "parallel")),
        cost_estimate=cost,
    )(x2d, trend_op)

    def _unfold(y):
        return jnp.transpose(y[:, :lanes].reshape(S, B, F), (1, 0, 2))

    return _unfold(seasonal2d), _unfold(trend2d)


def _reference(x, kernel_size=25):
    """Pure-JAX reference mirroring the torch module (pad/avg_pool/rfft/irfft)."""
    B, S, F = x.shape
    p = kernel_size // 2
    xp = jnp.pad(x, ((0, 0), (p, p), (0, 0)), mode="edge")
    c = jnp.cumsum(xp, axis=1)
    c = jnp.concatenate([jnp.zeros((B, 1, F), x.dtype), c], axis=1)
    trend_ma = (c[:, kernel_size:] - c[:, :-kernel_size]) / kernel_size

    xf = jnp.fft.rfft(x, axis=1)
    n_f = xf.shape[1]
    cutoff = int(0.2 * n_f)
    keep = (jnp.arange(n_f) < cutoff)[None, :, None]
    trend_freq = jnp.fft.irfft(jnp.where(keep, xf, 0), n=S, axis=1)

    trend = 0.7 * trend_ma + 0.3 * trend_freq
    return x - trend, trend


if __name__ == "__main__":
    B, S, F = 2, 96, 16          # small TimeMixer-like shapes
    KERNEL_SIZE = 25

    key = jax.random.PRNGKey(0)
    x = jax.random.normal(key, (B, S, F), jnp.float32)

    seasonal, trend = enhanced_decomposition(x, kernel_size=KERNEL_SIZE)
    seasonal = jax.block_until_ready(seasonal)
    trend = jax.block_until_ready(trend)

    seasonal_ref, trend_ref = _reference(x, kernel_size=KERNEL_SIZE)
    assert jnp.allclose(trend, trend_ref, atol=1e-3, rtol=1e-3), "trend mismatch vs reference"
    assert jnp.allclose(seasonal, seasonal_ref, atol=1e-3, rtol=1e-3), "seasonal mismatch vs reference"

    print("KERNEL_OK")
</pallas_src>

<mosaic_0001>
module attributes {stable_mosaic.version = 11 : i64} {
  func.func @_decomp_kernel(%arg0: i32, %arg1: i32, %arg2: memref<96x128xf32, #tpu.memory_space<vmem>>, %arg3: memref<96x96xf32, #tpu.memory_space<vmem>>, %arg4: memref<96x128xf32, #tpu.memory_space<vmem>>, %arg5: memref<96x128xf32, #tpu.memory_space<vmem>>) attributes {dimension_semantics = [#tpu.dimension_semantics<parallel>, #tpu.dimension_semantics<parallel>], iteration_bounds = array<i64: 1, 1>, scalar_prefetch = 0 : i64, scratch_operands = 0 : i64, tpu.core_type = #tpu.core_type<tc>, window_params = [{transform_indices = @transform_0, window_bounds = array<i64: 96, 128>}, {transform_indices = @transform_1, window_bounds = array<i64: 96, 96>}, {transform_indices = @transform_2, window_bounds = array<i64: 96, 128>}, {transform_indices = @transform_3, window_bounds = array<i64: 96, 128>}]} {
    %c0 = arith.constant 0 : index
    %c0_0 = arith.constant 0 : index
    %0 = vector.load %arg2[%c0, %c0_0] : memref<96x128xf32, #tpu.memory_space<vmem>>, vector<96x128xf32>
    %c0_1 = arith.constant 0 : index
    %c0_2 = arith.constant 0 : index
    %1 = vector.load %arg3[%c0_1, %c0_2] : memref<96x96xf32, #tpu.memory_space<vmem>>, vector<96x96xf32>
    %cst = arith.constant dense<0.000000e+00> : vector<96x128xf32>
    %2 = tpu.matmul %1, %0, %cst {dimension_numbers = #tpu.dot_dimension_numbers<[1], [0], [0], [1], [0, 0, 1, 1], [], []>} : vector<96x96xf32>, vector<96x128xf32>, vector<96x128xf32> -> vector<96x128xf32>
    %c0_3 = arith.constant 0 : index
    %c0_4 = arith.constant 0 : index
    %3 = vector.load %arg5[%c0_3, %c0_4] : memref<96x128xf32, #tpu.memory_space<vmem>>, vector<96x128xf32>
    tpu.vector_store %arg5[%c0_3, %c0_4], %2 {strides = array<i32>} : memref<96x128xf32, #tpu.memory_space<vmem>>, vector<96x128xf32>,
    %4 = arith.subf %0, %2 : vector<96x128xf32>
    %c0_5 = arith.constant 0 : index
    %c0_6 = arith.constant 0 : index
    %5 = vector.load %arg4[%c0_5, %c0_6] : memref<96x128xf32, #tpu.memory_space<vmem>>, vector<96x128xf32>
    tpu.vector_store %arg4[%c0_5, %c0_6], %4 {strides = array<i32>} : memref<96x128xf32, #tpu.memory_space<vmem>>, vector<96x128xf32>,
    return
  }
  func.func @transform_0(%arg0: i32, %arg1: i32) -> (i32, i32) {
    %c0_i32 = arith.constant 0 : i32
    %c0_i32_0 = arith.constant 0 : i32
    return %c0_i32, %arg1 : i32, i32
  }
  func.func @transform_1(%arg0: i32, %arg1: i32) -> (i32, i32) {
    %c0_i32 = arith.constant 0 : i32
    %c0_i32_0 = arith.constant 0 : i32
    return %arg0, %c0_i32 : i32, i32
  }
  func.func @transform_2(%arg0: i32, %arg1: i32) -> (i32, i32) {
    %c0_i32 = arith.constant 0 : i32
    return %arg0, %arg1 : i32, i32
  }
  func.func @transform_3(%arg0: i32, %arg1: i32) -> (i32, i32) {
    %c0_i32 = arith.constant 0 : i32
    return %arg0, %arg1 : i32, i32
  }
}

</mosaic_0001>

<llo_original>
// kernel: tpu_custom_call.1
$region0: #{tpu_custom_call.1}
  #allocation0 [shape = 'u32[]', space=smem, size = 0x4, offset = 0x4, fixed_abs, tag = 'smem constant byte address 0x4 - core index']
  #allocation1 [shape = 'u32[144,128]{1,0:T(1,128)}', space=vmem, size = 0x12000, scoped, tag = 'internal scratch']
  %s0 = inlined_call_operand.hbm [shape: f32[96,128], index: 0, kind: input, shape index: {}]
  %s1 = inlined_call_operand.hbm [shape: f32[96,96], index: 1, kind: input, shape index: {}]
  %s2 = inlined_call_operand.hbm [shape: f32[96,128], index: 2, kind: output, shape index: {0}]
  %s3 = inlined_call_operand.hbm [shape: f32[96,128], index: 3, kind: output, shape index: {1}]
  %4 = xla_tuple %s2, %s3
  %s5 = sld [smem:[#allocation0]]
  $region34: #{tpu_custom_call.1} parent=0
    _
  %s7 = ssub.s32 1, %s5
  %s8 = scalar_select 0, %s7, %s5
  $region1: #{tpu_custom_call.1} parent=0
    #allocation2 [shape = 'u8[49152]{0}', space=vmem, size = 0xc000, scoped, tag = 'input window, operand 0, single buffered']
    #allocation3 [shape = 's32[1]{0}', space=sflag, size = 0x4, scoped, tag = 'scoped memory for tpu_custom_call.1']
    #allocation4 [shape = 's32[1]{0}', space=sflag, size = 0x4, scoped, tag = 'scoped memory for tpu_custom_call.1']
    #allocation5 [shape = 'u8[49152]{0}', space=vmem, size = 0xc000, scoped, tag = 'input window, operand 1, single buffered']
    #allocation6 [shape = 's32[1]{0}', space=sflag, size = 0x4, scoped, tag = 'scoped memory for tpu_custom_call.1']
    #allocation7 [shape = 'u8[49152]{0}', space=vmem, size = 0xc000, scoped, tag = 'output window, operand 0, single buffered']
    #allocation8 [shape = 'u8[49152]{0}', space=vmem, size = 0xc000, scoped, tag = 'output window, operand 1, single buffered']
    #allocation9 [shape = 's32[1]{0}', space=sflag, size = 0x4, scoped, tag = 'scoped memory for tpu_custom_call.1']
    %9 = vsyncpa [#allocation3], 0
    %10 = vsyncpa [#allocation6], 0
    %11 = vsyncpa [#allocation4], 0
    %12 = vsyncpa [#allocation9], 0
    // Predicated region
    $region2: #{tpu_custom_call.1} parent=1 // pred_check
      _
    $region3: #{tpu_custom_call.1} parent=1 // pred_check_branch
      %14 = sbr.rel (0) target = $region5
    $region4: #{tpu_custom_call.1} parent=1 // pred_region
      %s16 = ssub.s32 1536, 1536
      %17 = vsyncadd [#allocation3], %s16
      %s18 = sshll.u32 [#allocation2], 4
      %s19 = int_to_ptr.vmem [resolvable:$true] %s18
      %24 = dma.hbm_to_vmem [thread:$0]  %s0, 1536, %s19, [#allocation3], 128, 128, 8
    $region5: #{tpu_custom_call.1} parent=1 // pred_fallthru
      _
    // Predicated region
    $region6: #{tpu_custom_call.1} parent=1 // pred_check
      _
    $region7: #{tpu_custom_call.1} parent=1 // pred_check_branch
      %26 = sbr.rel (0) target = $region9
    $region8: #{tpu_custom_call.1} parent=1 // pred_region
      %s28 = ssub.s32 1536, 1536
      %29 = vsyncadd [#allocation6], %s28
      %s30 = sshll.u32 [#allocation5], 4
      %s31 = int_to_ptr.vmem [resolvable:$true] %s30
      %36 = dma.hbm_to_vmem [thread:$0]  %s1, 1536, %s31, [#allocation6], 128, 128, 8
    $region9: #{tpu_custom_call.1} parent=1 // pred_fallthru
      _
    // Predicated region
    $region10: #{tpu_custom_call.1} parent=1 // pred_check
      _
    $region11: #{tpu_custom_call.1} parent=1 // pred_check_branch
      %38 = sbr.rel (0) target = $region13
    $region12: #{tpu_custom_call.1} parent=1 // pred_region
      %39 = dma.done [#allocation3], 1536
    $region13: #{tpu_custom_call.1} parent=1 // pred_fallthru
      _
    // Predicated region
    $region14: #{tpu_custom_call.1} parent=1 // pred_check
      _
    $region15: #{tpu_custom_call.1} parent=1 // pred_check_branch
      %41 = sbr.rel (0) target = $region17
    $region16: #{tpu_custom_call.1} parent=1 // pred_region
      %42 = dma.done [#allocation6], 1536
    $region17: #{tpu_custom_call.1} parent=1 // pred_fallthru
      _
    %v43 = vld [vmem:[#allocation2] sm:$0xff]
    %v44 = vld [vmem:[#allocation2 + $0x8] sm:$0xff]
    %v45 = vld [vmem:[#allocation2 + $0x10] sm:$0xff]
    %v46 = vld [vmem:[#allocation2 + $0x18] sm:$0xff]
    %v47 = vld [vmem:[#allocation2 + $0x20] sm:$0xff]
    %v48 = vld [vmem:[#allocation2 + $0x28] sm:$0xff]
    %v49 = vld [vmem:[#allocation2 + $0x30] sm:$0xff]
    %v50 = vld [vmem:[#allocation2 + $0x38] sm:$0xff]
    %v51 = vld [vmem:[#allocation2 + $0x40] sm:$0xff]
    %v52 = vld [vmem:[#allocation2 + $0x48] sm:$0xff]
    %v53 = vld [vmem:[#allocation2 + $0x50] sm:$0xff]
    %v54 = vld [vmem:[#allocation2 + $0x58] sm:$0xff]
    %v55 = vld [vmem:[#allocation5] sm:$0xff]
    %v56 = vld [vmem:[#allocation5 + $0x8] sm:$0xff]
    %v57 = vld [vmem:[#allocation5 + $0x10] sm:$0xff]
    %v58 = vld [vmem:[#allocation5 + $0x18] sm:$0xff]
    %v59 = vld [vmem:[#allocation5 + $0x20] sm:$0xff]
    %v60 = vld [vmem:[#allocation5 + $0x28] sm:$0xff]
    %v61 = vld [vmem:[#allocation5 + $0x30] sm:$0xff]
    %v62 = vld [vmem:[#allocation5 + $0x38] sm:$0xff]
    %v63 = vld [vmem:[#allocation5 + $0x40] sm:$0xff]
    %v64 = vld [vmem:[#allocation5 + $0x48] sm:$0xff]
    %v65 = vld [vmem:[#allocation5 + $0x50] sm:$0xff]
    %v66 = vld [vmem:[#allocation5 + $0x58] sm:$0xff]
    %vm67 = vcmask 785408
    %v69 = vsel %vm67, %v55, 0
    %v72 = vsel %vm67, %v56, 0
    %v75 = vsel %vm67, %v57, 0
    %v78 = vsel %vm67, %v58, 0
    %v81 = vsel %vm67, %v59, 0
    %v84 = vsel %vm67, %v60, 0
    %v87 = vsel %vm67, %v61, 0
    %v90 = vsel %vm67, %v62, 0
    %v93 = vsel %vm67, %v63, 0
    %v96 = vsel %vm67, %v64, 0
    %v99 = vsel %vm67, %v65, 0
    %v102 = vsel %vm67, %v66, 0
    %104 = vmatprep.subr.mxu0 0.0
    %105 = vmatpush1.msra.mxu0 0.0
    %106 = vmatprep.subr.mxu0 0.0
    %107 = vmatpush1.msra.mxu0 0.0
    %108 = vmatprep.subr.mxu0 0.0
    %109 = vmatpush1.msra.mxu0 0.0
    %110 = vmatprep.subr.mxu0 0.0
    %111 = vmatpush1.msra.mxu0 0.0
    %112 = vmatprep.subr.mxu0 0.0
    %113 = vmatpush1.msra.mxu0 %v54
    %114 = vmatprep.subr.mxu0 0.0
    %115 = vmatpush1.msra.mxu0 %v53
    %116 = vmatprep.subr.mxu0 0.0
    %117 = vmatpush1.msra.mxu0 %v52
    %118 = vmatprep.subr.mxu0 0.0
    %119 = vmatpush1.msra.mxu0 %v51
    %120 = vmatprep.subr.mxu0 0.0
    %121 = vmatpush1.msra.mxu0 %v50
    %122 = vmatprep.subr.mxu0 0.0
    %123 = vmatpush1.msra.mxu0 %v49
    %124 = vmatprep.subr.mxu0 0.0
    %125 = vmatpush1.msra.mxu0 %v48
    %126 = vmatprep.subr.mxu0 0.0
    %127 = vmatpush1.msra.mxu0 %v47
    %128 = vmatprep.subr.mxu0 0.0
    %129 = vmatpush1.msra.mxu0 %v46
    %130 = vmatprep.subr.mxu0 0.0
    %131 = vmatpush1.msra.mxu0 %v45
    %132 = vmatprep.subr.mxu0 0.0
    %133 = vmatpush1.msra.mxu0 %v44
    %134 = vmatprep.subr.mxu0 0.0
    %135 = vmatpush1.msra.mxu0 %v43
    %136 = vmatprep.subr.mxu0 0.0
    %137 = vmatpush2.msra.mxu0 0.0
    %138 = vmatprep.subr.mxu0 0.0
    %139 = vmatpush2.msra.mxu0 0.0
    %140 = vmatprep.subr.mxu0 0.0
    %141 = vmatpush2.msra.mxu0 0.0
    %142 = vmatprep.subr.mxu0 0.0
    %143 = vmatpush2.msra.mxu0 0.0
    %144 = vmatprep.subr.mxu0 0.0
    %145 = vmatpush2.msra.mxu0 0.0
    %146 = vmatprep.subr.mxu0 0.0
    %147 = vmatpush2.msra.mxu0 0.0
    %148 = vmatprep.subr.mxu0 0.0
    %149 = vmatpush2.msra.mxu0 0.0
    %150 = vmatprep.subr.mxu0 0.0
    %151 = vmatpush2.msra.mxu0 0.0
    %152 = vmatprep.subr.mxu0 0.0
    %153 = vmatpush2.msra.mxu0 0.0
    %154 = vmatprep.subr.mxu0 0.0
    %155 = vmatpush2.msra.mxu0 0.0
    %156 = vmatprep.subr.mxu0 0.0
    %157 = vmatpush2.msra.mxu0 0.0
    %158 = vmatprep.subr.mxu0 0.0
    %159 = vmatpush2.msra.mxu0 0.0
    %160 = vmatprep.subr.mxu0 0.0
    %161 = vmatpush2.msra.mxu0 0.0
    %162 = vmatprep.subr.mxu0 0.0
    %163 = vmatpush2.msra.mxu0 0.0
    %164 = vmatprep.subr.mxu0 0.0
    %165 = vmatpush2.msra.mxu0 0.0
    %166 = vmatprep.subr.mxu0 0.0
    %167 = vmatpush2.msra.mxu0 0.0
    %168 = vmatprep.mubr.f32.mxu0 0.0
    %169 = vmatmul.mubr.f32.gmra.mxu0 %v69
    %v170 = vpop.f32.mrf.mxu0
    %v171 = vadd.f32 0.0, %v170
    %v172 = vpop.f32.mrf.mxu0
    %173 = vmatprep.mubr.f32.mxu0 0.0
    %174 = vmatmul.mubr.f32.gmra.mxu0 %v72
    %v175 = vpop.f32.mrf.mxu0
    %v176 = vadd.f32 0.0, %v175
    %v177 = vpop.f32.mrf.mxu0
    %178 = vmatprep.mubr.f32.mxu0 0.0
    %179 = vmatmul.mubr.f32.gmra.mxu0 %v75
    %v180 = vpop.f32.mrf.mxu0
    %v181 = vadd.f32 0.0, %v180
    %v182 = vpop.f32.mrf.mxu0
    %183 = vmatprep.mubr.f32.mxu0 0.0
    %184 = vmatmul.mubr.f32.gmra.mxu0 %v78
    %v185 = vpop.f32.mrf.mxu0
    %v186 = vadd.f32 0.0, %v185
    %v187 = vpop.f32.mrf.mxu0
    %188 = vmatprep.mubr.f32.mxu0 0.0
    %189 = vmatmul.mubr.f32.gmra.mxu0 %v81
    %v190 = vpop.f32.mrf.mxu0
    %v191 = vadd.f32 0.0, %v190
    %v192 = vpop.f32.mrf.mxu0
    %193 = vmatprep.mubr.f32.mxu0 0.0
    %194 = vmatmul.mubr.f32.gmra.mxu0 %v84
    %v195 = vpop.f32.mrf.mxu0
    %v196 = vadd.f32 0.0, %v195
    %v197 = vpop.f32.mrf.mxu0
    %198 = vmatprep.mubr.f32.mxu0 0.0
    %199 = vmatmul.mubr.f32.gmra.mxu0 %v87
    %v200 = vpop.f32.mrf.mxu0
    %v201 = vadd.f32 0.0, %v200
    %v202 = vpop.f32.mrf.mxu0
    %203 = vmatprep.mubr.f32.mxu0 0.0
    %204 = vmatmul.mubr.f32.gmra.mxu0 %v90
    %v205 = vpop.f32.mrf.mxu0
    %v206 = vadd.f32 0.0, %v205
    %v207 = vpop.f32.mrf.mxu0
    %208 = vmatprep.mubr.f32.mxu0 0.0
    %209 = vmatmul.mubr.f32.gmra.mxu0 %v93
    %v210 = vpop.f32.mrf.mxu0
    %v211 = vadd.f32 0.0, %v210
    %v212 = vpop.f32.mrf.mxu0
    %213 = vmatprep.mubr.f32.mxu0 0.0
    %214 = vmatmul.mubr.f32.gmra.mxu0 %v96
    %v215 = vpop.f32.mrf.mxu0
    %v216 = vadd.f32 0.0, %v215
    %v217 = vpop.f32.mrf.mxu0
    %218 = vmatprep.mubr.f32.mxu0 0.0
    %219 = vmatmul.mubr.f32.gmra.mxu0 %v99
    %v220 = vpop.f32.mrf.mxu0
    %v221 = vadd.f32 0.0, %v220
    %v222 = vpop.f32.mrf.mxu0
    %223 = vmatprep.mubr.f32.mxu0 0.0
    %224 = vmatmul.mubr.f32.gmra.mxu0 %v102
    %v225 = vpop.f32.mrf.mxu0
    %v226 = vadd.f32 0.0, %v225
    %v227 = vpop.f32.mrf.mxu0
    %228 = vdwg.mxu0
    %229 = vst [vmem:[#allocation8] sm:$0xff] %v171
    %230 = vst [vmem:[#allocation8 + $0x8] sm:$0xff] %v176
    %231 = vst [vmem:[#allocation8 + $0x10] sm:$0xff] %v181
    %232 = vst [vmem:[#allocation8 + $0x18] sm:$0xff] %v186
    %233 = vst [vmem:[#allocation8 + $0x20] sm:$0xff] %v191
    %234 = vst [vmem:[#allocation8 + $0x28] sm:$0xff] %v196
    %235 = vst [vmem:[#allocation8 + $0x30] sm:$0xff] %v201
    %236 = vst [vmem:[#allocation8 + $0x38] sm:$0xff] %v206
    %237 = vst [vmem:[#allocation8 + $0x40] sm:$0xff] %v211
    %238 = vst [vmem:[#allocation8 + $0x48] sm:$0xff] %v216
    %239 = vst [vmem:[#allocation8 + $0x50] sm:$0xff] %v221
    %240 = vst [vmem:[#allocation8 + $0x58] sm:$0xff] %v226
    %v241 = vsub.f32 %v43, %v171
    %v242 = vsub.f32 %v44, %v176
    %v243 = vsub.f32 %v45, %v181
    %v244 = vsub.f32 %v46, %v186
    %v245 = vsub.f32 %v47, %v191
    %v246 = vsub.f32 %v48, %v196
    %v247 = vsub.f32 %v49, %v201
    %v248 = vsub.f32 %v50, %v206
    %v249 = vsub.f32 %v51, %v211
    %v250 = vsub.f32 %v52, %v216
    %v251 = vsub.f32 %v53, %v221
    %v252 = vsub.f32 %v54, %v226
    %253 = vst [vmem:[#allocation7] sm:$0xff] %v241
    %254 = vst [vmem:[#allocation7 + $0x8] sm:$0xff] %v242
    %255 = vst [vmem:[#allocation7 + $0x10] sm:$0xff] %v243
    %256 = vst [vmem:[#allocation7 + $0x18] sm:$0xff] %v244
    %257 = vst [vmem:[#allocation7 + $0x20] sm:$0xff] %v245
    %258 = vst [vmem:[#allocation7 + $0x28] sm:$0xff] %v246
    %259 = vst [vmem:[#allocation7 + $0x30] sm:$0xff] %v247
    %260 = vst [vmem:[#allocation7 + $0x38] sm:$0xff] %v248
    %261 = vst [vmem:[#allocation7 + $0x40] sm:$0xff] %v249
    %262 = vst [vmem:[#allocation7 + $0x48] sm:$0xff] %v250
    %263 = vst [vmem:[#allocation7 + $0x50] sm:$0xff] %v251
    %264 = vst [vmem:[#allocation7 + $0x58] sm:$0xff] %v252
    // Predicated region
    $region18: #{tpu_custom_call.1} parent=1 // pred_check
      _
    $region19: #{tpu_custom_call.1} parent=1 // pred_check_branch
      %266 = sbr.rel (0) target = $region21
    $region20: #{tpu_custom_call.1} parent=1 // pred_region
      %s268 = ssub.s32 1536, 1536
      %269 = vsyncadd [#allocation4], %s268
      %s270 = sshll.u32 [#allocation7], 4
      %s271 = int_to_ptr.vmem [resolvable:$true] %s270
      %276 = dma.vmem_to_hbm [thread:$0]  %s271, 1536, %s2, [#allocation4], 128, 128, 8
    $region21: #{tpu_custom_call.1} parent=1 // pred_fallthru
      _
    // Predicated region
    $region22: #{tpu_custom_call.1} parent=1 // pred_check
      _
    $region23: #{tpu_custom_call.1} parent=1 // pred_check_branch
      %278 = sbr.rel (0) target = $region25
    $region24: #{tpu_custom_call.1} parent=1 // pred_region
      %s280 = ssub.s32 1536, 1536
      %281 = vsyncadd [#allocation9], %s280
      %s282 = sshll.u32 [#allocation8], 4
      %s283 = int_to_ptr.vmem [resolvable:$true] %s282
      %288 = dma.vmem_to_hbm [thread:$0]  %s283, 1536, %s3, [#allocation9], 128, 128, 8
    $region25: #{tpu_custom_call.1} parent=1 // pred_fallthru
      _
    // Predicated region
    $region26: #{tpu_custom_call.1} parent=1 // pred_check
      _
    $region27: #{tpu_custom_call.1} parent=1 // pred_check_branch
      %290 = sbr.rel (0) target = $region29
    $region28: #{tpu_custom_call.1} parent=1 // pred_region
      %291 = dma.done [#allocation4], 1536
    $region29: #{tpu_custom_call.1} parent=1 // pred_fallthru
      _
    // Predicated region
    $region30: #{tpu_custom_call.1} parent=1 // pred_check
      _
    $region31: #{tpu_custom_call.1} parent=1 // pred_check_branch
      %293 = sbr.rel (0) target = $region33
    $region32: #{tpu_custom_call.1} parent=1 // pred_region
      %294 = dma.done [#allocation9], 1536
    $region33: #{tpu_custom_call.1} parent=1 // pred_fallthru
      _
    %295 = vsyncpa [#allocation3], 1
    %296 = vsyncpa [#allocation6], 1
    %297 = vsyncpa [#allocation4], 1
    %298 = vsyncpa [#allocation9], 1

</llo_original>
